<compile_context>
chip_gen: v5e
topology: v5e:2x2
jax: 0.10.0
libtpu: 0.0.40
codegen_flags: <defaults>
</compile_context>

<pallas_src>
import functools

import jax
import jax.numpy as jnp
from jax.experimental import pallas as pl
from jax.experimental.pallas import tpu as pltpu


def _recon_kernel(mask_ref, x_ref, o_ref):
    # mask_ref: (1, N1, 2*N2) resident mask block.
    # x_ref/o_ref: (T, N1, 2*N2) kspace tile.  Plain per-vreg multiply with
    # implicit broadcasting over the leading axis (no explicit broadcast_in_dim).
    o_ref[...] = x_ref[...] * mask_ref[...]


def _choose_block_slices(num_slices, slice_bytes, max_tile_bytes=4 << 20):
    """Largest divisor T of num_slices such that the (T, N1, 2*N2) tile stays under
    max_tile_bytes and (when possible) the grid has >= 2 steps."""
    best = 1
    for t in range(1, num_slices + 1):
        if num_slices % t:
            continue
        if t * slice_bytes > max_tile_bytes:
            break
        if num_slices == 1 or (num_slices // t) >= 2:
            best = t
    return best


@functools.partial(jax.jit, static_argnames=("reso",))
def recon_forward(kspace, weight, *, reso):
    """kspace: (B, Nc, N1, N2, 2) float32; weight: (N1-32*reso, N2-32*reso)."""
    B, nc, n1, n2, two = kspace.shape
    assert two == 2
    lo = 16 * reso

    # Build the full-resolution mask and duplicate along real/imag (fused in-jit).
    mask = jnp.zeros((n1, n2), dtype=kspace.dtype)
    mask = mask.at[lo:n1 - lo, lo:n2 - lo].set(weight.astype(kspace.dtype))
    mask2 = jnp.repeat(mask, 2, axis=-1).reshape(1, n1, 2 * n2)   # (1, N1, 2*N2)

    num_slices = B * nc
    lane = 2 * n2                                    # multiple of 128 for N2 in {64, 320, ...}
    slice_bytes = n1 * lane * kspace.dtype.itemsize
    T = _choose_block_slices(num_slices, slice_bytes)
    grid_n = num_slices // T

    x = kspace.reshape(num_slices, n1, lane)

    out = pl.pallas_call(
        _recon_kernel,
        out_shape=jax.ShapeDtypeStruct((num_slices, n1, lane), kspace.dtype),
        grid_spec=pltpu.PrefetchScalarGridSpec(
            num_scalar_prefetch=0,
            grid=(grid_n,),
            in_specs=[
                # Constant index_map -> mask stays resident in VMEM (DMA'd once).
                pl.BlockSpec((1, n1, lane), lambda i: (0, 0, 0)),
                # T slices of kspace per grid step (~MiB-scale tile).
                pl.BlockSpec((T, n1, lane), lambda i: (i, 0, 0)),
            ],
            out_specs=pl.BlockSpec((T, n1, lane), lambda i: (i, 0, 0)),
        ),
        compiler_params=pltpu.CompilerParams(
            dimension_semantics=("parallel",),
            # 2x-buffered in + 2x-buffered out + resident mask stays well under
            # this on every generation (v5e/v6e/v7x).
            vmem_limit_bytes=32 << 20,
        ),
    )(mask2, x)

    return out.reshape(B, nc, n1, n2, 2)


def recon_reference(kspace, weight, reso):
    B, nc, n1, n2, _ = kspace.shape
    lo = 16 * reso
    mask = jnp.zeros((n1, n2), dtype=kspace.dtype)
    mask = mask.at[lo:n1 - lo, lo:n2 - lo].set(weight)
    return mask[None, None, :, :, None] * kspace


if __name__ == "__main__":
    # Scaled-down constants (module uses N1=N2=320, Nc=16, reso=5).
    N1 = 64
    N2 = 64
    Nc = 4
    reso = 1
    B = 2

    key = jax.random.PRNGKey(0)
    kspace = jax.random.normal(key, (B, Nc, N1, N2, 2), dtype=jnp.float32)

    # Deterministic parameter init, matching the module's __init__.
    weight = 0.01 * jnp.ones((N1 - 32 * reso, N2 - 32 * reso), dtype=jnp.float32)

    out = recon_forward(kspace, weight, reso=reso)
    out = jax.block_until_ready(out)

    ref = recon_reference(kspace, weight, reso)
    assert out.shape == kspace.shape
    assert jnp.allclose(out, ref, atol=1e-6, rtol=1e-6)

    print("KERNEL_OK")
</pallas_src>

<mosaic_0001>
module attributes {stable_mosaic.version = 11 : i64} {
  func.func @_recon_kernel(%arg0: i32, %arg1: memref<1x64x128xf32, #tpu.memory_space<vmem>>, %arg2: memref<4x64x128xf32, #tpu.memory_space<vmem>>, %arg3: memref<4x64x128xf32, #tpu.memory_space<vmem>>) attributes {dimension_semantics = [#tpu.dimension_semantics<parallel>], iteration_bounds = array<i64: 2>, scalar_prefetch = 0 : i64, scratch_operands = 0 : i64, tpu.core_type = #tpu.core_type<tc>, window_params = [{pipeline_mode = #tpu.pipeline_mode<synchronous>, transform_indices = @transform_0, window_bounds = array<i64: 1, 64, 128>}, {transform_indices = @transform_1, window_bounds = array<i64: 4, 64, 128>}, {transform_indices = @transform_2, window_bounds = array<i64: 4, 64, 128>}]} {
    %c0 = arith.constant 0 : index
    %c0_0 = arith.constant 0 : index
    %c0_1 = arith.constant 0 : index
    %0 = vector.load %arg2[%c0, %c0_0, %c0_1] : memref<4x64x128xf32, #tpu.memory_space<vmem>>, vector<4x64x128xf32>
    %c0_2 = arith.constant 0 : index
    %c0_3 = arith.constant 0 : index
    %c0_4 = arith.constant 0 : index
    %1 = vector.load %arg1[%c0_2, %c0_3, %c0_4] : memref<1x64x128xf32, #tpu.memory_space<vmem>>, vector<1x64x128xf32>
    %2 = vector.broadcast %1 : vector<1x64x128xf32> to vector<4x64x128xf32>
    %3 = arith.mulf %0, %2 : vector<4x64x128xf32>
    %c0_5 = arith.constant 0 : index
    %c0_6 = arith.constant 0 : index
    %c0_7 = arith.constant 0 : index
    %4 = vector.load %arg3[%c0_5, %c0_6, %c0_7] : memref<4x64x128xf32, #tpu.memory_space<vmem>>, vector<4x64x128xf32>
    tpu.vector_store %arg3[%c0_5, %c0_6, %c0_7], %3 {strides = array<i32>} : memref<4x64x128xf32, #tpu.memory_space<vmem>>, vector<4x64x128xf32>,
    return
  }
  func.func @transform_0(%arg0: i32) -> (i32, i32, i32) {
    %c0_i32 = arith.constant 0 : i32
    %c0_i32_0 = arith.constant 0 : i32
    %c0_i32_1 = arith.constant 0 : i32
    %c0_i32_2 = arith.constant 0 : i32
    return %c0_i32, %c0_i32_0, %c0_i32_1 : i32, i32, i32
  }
  func.func @transform_1(%arg0: i32) -> (i32, i32, i32) {
    %c0_i32 = arith.constant 0 : i32
    %c0_i32_0 = arith.constant 0 : i32
    %c0_i32_1 = arith.constant 0 : i32
    return %arg0, %c0_i32, %c0_i32_0 : i32, i32, i32
  }
  func.func @transform_2(%arg0: i32) -> (i32, i32, i32) {
    %c0_i32 = arith.constant 0 : i32
    %c0_i32_0 = arith.constant 0 : i32
    %c0_i32_1 = arith.constant 0 : i32
    return %arg0, %c0_i32, %c0_i32_0 : i32, i32, i32
  }
}

</mosaic_0001>

<llo_original>
// kernel: recon_forward.1
$region0: #{recon_forward.1}
  #allocation0 [shape = 'u32[]', space=smem, size = 0x4, offset = 0x4, fixed_abs, tag = 'smem constant byte address 0x4 - core index']
  #allocation1 [shape = 'u32[72,128]{1,0:T(1,128)}', space=vmem, size = 0x9000, scoped, tag = 'internal scratch']
  %s0 = inlined_call_operand.vmem [shape: f32[1,64,128], index: 0, kind: input, shape index: {}]
  %s1 = inlined_call_operand.vmem [shape: f32[8,64,128], index: 1, kind: input, shape index: {}]
  %s2 = inlined_call_operand.vmem [shape: f32[8,64,128], index: 2, kind: output, shape index: {}]
  %s3 = sld [smem:[#allocation0]]
  $region41: #{recon_forward.1} parent=0
    _
  %s5 = ssub.s32 1, %s3
  %s6 = scalar_select 0, %s5, %s3
  loop: start=0, step=1, limit=4
  $region2: #{recon_forward.1} parent=0 // loop_pre_header
    _
  $region3: #{recon_forward.1} parent=0 // loop_header
    %s8 = sphi 0, %s12
    %p9 = scmp.ge.s32.totalorder %s8, 4
    %s16 = sphi 0, %s16
    %s18 = sphi 0, %s16
    %s19 = sphi 0, %s18
    %s33 = sphi 0, %s19
    %s39 = sphi 0, %s41
    %s42 = sphi 0, %s39
    %s43 = sphi 0, %s42
    %s59 = sphi 0, %s43
    %s65 = sphi 0, %s67
    %s68 = sphi 0, %s65
    %s69 = sphi 0, %s68
    %s85 = sphi 0, %s69
  $region4: #{recon_forward.1} parent=0 // loop_header_branch
    %11 = sbr.rel (%p9) target = $region8
  $region5: #{recon_forward.1} parent=0 // loop_body
    %s13 = ssub.s32 %s8, 1
    %s14 = ssub.s32 %s8, 2
    %s15 = sadd.s32 %s8, 1
    %s17 = sadd.s32 %s16, 1
    %p20 = scmp.eq.s32.totalorder %s8, 1
    %p21 = scmp.ne.s32.totalorder %s16, %s18
    %p22 = scmp.eq.s32.totalorder %s8, 0
    %p23 = por %p21, %p22
    %p24 = scmp.ne.s32.totalorder %s16, %s18
    %p25 = scmp.eq.s32.totalorder %s13, 1
    %p26 = por %p24, %p25
    %p27 = scmp.ne.s32.totalorder %s18, %s19
    %p28 = scmp.eq.s32.totalorder %s13, 0
    %p29 = por %p27, %p28
    %p30 = scmp.ne.s32.totalorder %s18, %s19
    %p31 = scmp.eq.s32.totalorder %s14, 1
    %p32 = por %p30, %p31
    %p34 = scmp.ne.s32.totalorder %s19, %s33
    %p35 = scmp.eq.s32.totalorder %s14, 0
    %p36 = por %p34, %p35
    %s37 = ssub.s32 %s8, %s15
    %p38 = scmp.eq.s32.totalorder %s37, 0
    %s40 = sadd.s32 %s39, 1
    %s41 = scalar_select %p38, %s39, %s40
    %p44 = pneg %p38
    %p45 = scmp.eq.s32.totalorder %s8, 1
    %p46 = por %p44, %p45
    %p47 = scmp.ne.s32.totalorder %s39, %s42
    %p48 = scmp.eq.s32.totalorder %s8, 0
    %p49 = por %p47, %p48
    %p50 = scmp.ne.s32.totalorder %s39, %s42
    %p51 = scmp.eq.s32.totalorder %s13, 1
    %p52 = por %p50, %p51
    %p53 = scmp.ne.s32.totalorder %s42, %s43
    %p54 = scmp.eq.s32.totalorder %s13, 0
    %p55 = por %p53, %p54
    %p56 = scmp.ne.s32.totalorder %s42, %s43
    %p57 = scmp.eq.s32.totalorder %s14, 1
    %p58 = por %p56, %p57
    %p60 = scmp.ne.s32.totalorder %s43, %s59
    %p61 = scmp.eq.s32.totalorder %s14, 0
    %p62 = por %p60, %p61
    %s63 = ssub.s32 %s8, %s15
    %p64 = scmp.eq.s32.totalorder %s63, 0
    %s66 = sadd.s32 %s65, 1
    %s67 = scalar_select %p64, %s65, %s66
    %p70 = pneg %p64
    %p71 = scmp.eq.s32.totalorder %s8, 1
    %p72 = por %p70, %p71
    %p73 = scmp.ne.s32.totalorder %s65, %s68
    %p74 = scmp.eq.s32.totalorder %s8, 0
    %p75 = por %p73, %p74
    %p76 = scmp.ne.s32.totalorder %s65, %s68
    %p77 = scmp.eq.s32.totalorder %s13, 1
    %p78 = por %p76, %p77
    %p79 = scmp.ne.s32.totalorder %s68, %s69
    %p80 = scmp.eq.s32.totalorder %s13, 0
    %p81 = por %p79, %p80
    %p82 = scmp.ne.s32.totalorder %s68, %s69
    %p83 = scmp.eq.s32.totalorder %s14, 1
    %p84 = por %p82, %p83
    %p86 = scmp.ne.s32.totalorder %s69, %s85
    %p87 = scmp.eq.s32.totalorder %s14, 0
    %p88 = por %p86, %p87
    %p89 = scmp.le.s32.totalorder 1, %s8
    %p90 = scmp.lt.s32.totalorder %s8, 3
    %p91 = pnand %p89, %p90
    %p92 = pneg %p91
    // Predicated region
    $region9: #{recon_forward.1} parent=5 // pred_check
      _
    $region10: #{recon_forward.1} parent=5 // pred_check_branch
      %94 = sbr.rel (%p91) target = $region12
    $region11: #{recon_forward.1} parent=5 // pred_region
      %s95 = ssub.s32 %s8, 1
      // Predicated region
      $region13: #{recon_forward.1} parent=11 // pred_check
        %p96 = pneg %p29
      $region14: #{recon_forward.1} parent=11 // pred_check_branch
        %98 = sbr.rel (%p96) target = $region16
      $region15: #{recon_forward.1} parent=11 // pred_region
        _
      $region16: #{recon_forward.1} parent=11 // pred_fallthru
        _
    $region12: #{recon_forward.1} parent=5 // pred_fallthru
      _
    %p99 = scmp.lt.s32.totalorder %s8, 2
    // Predicated region
    $region17: #{recon_forward.1} parent=5 // pred_check
      %p100 = pneg %p99
    $region18: #{recon_forward.1} parent=5 // pred_check_branch
      %102 = sbr.rel (%p100) target = $region20
    $region19: #{recon_forward.1} parent=5 // pred_region
      // Predicated region
      $region21: #{recon_forward.1} parent=19 // pred_check
        %p103 = pneg %p49
      $region22: #{recon_forward.1} parent=19 // pred_check_branch
        %105 = sbr.rel (%p103) target = $region24
      $region23: #{recon_forward.1} parent=19 // pred_region
        %s106 = smul.u32 4, %s8
        %p107 = scmp.lt.s32.totalorder %s106, 7
        %s108 = scalar_select %p107, %s106, 7
        %s109 = smul.addr %s108, 8
        %s110 = smul.addr %s109, 8
        %s111 = scalar_lea.vmem %s1, %s110
        %s112 = smul.u32 4, %s8
      $region24: #{recon_forward.1} parent=19 // pred_fallthru
        _
    $region20: #{recon_forward.1} parent=5 // pred_fallthru
      _
    %p113 = scmp.le.s32.totalorder 1, %s8
    %p114 = scmp.lt.s32.totalorder %s8, 3
    %p115 = pnand %p113, %p114
    %p116 = pneg %p115
    // Predicated region
    $region25: #{recon_forward.1} parent=5 // pred_check
      _
    $region26: #{recon_forward.1} parent=5 // pred_check_branch
      %118 = sbr.rel (%p115) target = $region28
    $region27: #{recon_forward.1} parent=5 // pred_region
      %s119 = ssub.s32 %s8, 1
      %p120 = pneg %p29
      %p121 = pneg %p26
      %s122 = smul.u32 4, %s13
      %p123 = scmp.lt.s32.totalorder %s122, 7
      %s124 = scalar_select %p123, %s122, 7
      %s125 = smul.addr %s124, 8
      %s126 = smul.addr %s125, 8
      %s127 = scalar_lea.vmem %s1, %s126
      %p128 = pneg %p55
      %p129 = pneg %p52
      %p130 = pneg %p81
      %p131 = pneg %p78
      %s132 = smul.u32 4, %s13
      %p133 = scmp.lt.s32.totalorder %s132, 7
      %s134 = scalar_select %p133, %s132, 7
      %s135 = smul.addr %s134, 8
      %s136 = smul.addr %s135, 8
      %s137 = scalar_lea.vmem %s2, %s136
      %s138 = smul.u32 4, %s13
      %p139 = scmp.lt.s32.totalorder %s138, 7
      %s140 = scalar_select %p139, %s138, 7
      %s141 = smul.addr %s140, 8
      %s142 = smul.addr %s141, 8
      %s143 = scalar_lea.vmem %s1, %s142
      %s144 = smul.u32 4, %s13
      %s145 = smul.u32 4, %s13
      %p146 = scmp.lt.s32.totalorder %s145, 7
      %s147 = scalar_select %p146, %s145, 7
      %s148 = smul.addr %s147, 8
      %s149 = smul.addr %s148, 8
      %s150 = scalar_lea.vmem %s2, %s149
      %s151 = smul.u32 4, %s13
      %v152 = vld [vmem:[%s143] sm:$0xff]
      %v153 = vld [vmem:[%s143 + $0x8] sm:$0xff]
      %v154 = vld [vmem:[%s143 + $0x10] sm:$0xff]
      %v155 = vld [vmem:[%s143 + $0x18] sm:$0xff]
      %v156 = vld [vmem:[%s143 + $0x20] sm:$0xff]
      %v157 = vld [vmem:[%s143 + $0x28] sm:$0xff]
      %v158 = vld [vmem:[%s143 + $0x30] sm:$0xff]
      %v159 = vld [vmem:[%s143 + $0x38] sm:$0xff]
      %v160 = vld [vmem:[%s143 + $0x40] sm:$0xff]
      %v161 = vld [vmem:[%s143 + $0x48] sm:$0xff]
      %v162 = vld [vmem:[%s143 + $0x50] sm:$0xff]
      %v163 = vld [vmem:[%s143 + $0x58] sm:$0xff]
      %v164 = vld [vmem:[%s143 + $0x60] sm:$0xff]
      %v165 = vld [vmem:[%s143 + $0x68] sm:$0xff]
      %v166 = vld [vmem:[%s143 + $0x70] sm:$0xff]
      %v167 = vld [vmem:[%s143 + $0x78] sm:$0xff]
      %v168 = vld [vmem:[%s143 + $0x80] sm:$0xff]
      %v169 = vld [vmem:[%s143 + $0x88] sm:$0xff]
      %v170 = vld [vmem:[%s143 + $0x90] sm:$0xff]
      %v171 = vld [vmem:[%s143 + $0x98] sm:$0xff]
      %v172 = vld [vmem:[%s143 + $0xa0] sm:$0xff]
      %v173 = vld [vmem:[%s143 + $0xa8] sm:$0xff]
      %v174 = vld [vmem:[%s143 + $0xb0] sm:$0xff]
      %v175 = vld [vmem:[%s143 + $0xb8] sm:$0xff]
      %v176 = vld [vmem:[%s143 + $0xc0] sm:$0xff]
      %v177 = vld [vmem:[%s143 + $0xc8] sm:$0xff]
      %v178 = vld [vmem:[%s143 + $0xd0] sm:$0xff]
      %v179 = vld [vmem:[%s143 + $0xd8] sm:$0xff]
      %v180 = vld [vmem:[%s143 + $0xe0] sm:$0xff]
      %v181 = vld [vmem:[%s143 + $0xe8] sm:$0xff]
      %v182 = vld [vmem:[%s143 + $0xf0] sm:$0xff]
      %v183 = vld [vmem:[%s143 + $0xf8] sm:$0xff]
      %v184 = vld [vmem:[%s0] sm:$0xff]
      %v185 = vld [vmem:[%s0 + $0x8] sm:$0xff]
      %v186 = vld [vmem:[%s0 + $0x10] sm:$0xff]
      %v187 = vld [vmem:[%s0 + $0x18] sm:$0xff]
      %v188 = vld [vmem:[%s0 + $0x20] sm:$0xff]
      %v189 = vld [vmem:[%s0 + $0x28] sm:$0xff]
      %v190 = vld [vmem:[%s0 + $0x30] sm:$0xff]
      %v191 = vld [vmem:[%s0 + $0x38] sm:$0xff]
      %v192 = vmul.f32 %v152, %v184
      %v193 = vmul.f32 %v153, %v185
      %v194 = vmul.f32 %v154, %v186
      %v195 = vmul.f32 %v155, %v187
      %v196 = vmul.f32 %v156, %v188
      %v197 = vmul.f32 %v157, %v189
      %v198 = vmul.f32 %v158, %v190
      %v199 = vmul.f32 %v159, %v191
      %v200 = vmul.f32 %v160, %v184
      %v201 = vmul.f32 %v161, %v185
      %v202 = vmul.f32 %v162, %v186
      %v203 = vmul.f32 %v163, %v187
      %v204 = vmul.f32 %v164, %v188
      %v205 = vmul.f32 %v165, %v189
      %v206 = vmul.f32 %v166, %v190
      %v207 = vmul.f32 %v167, %v191
      %v208 = vmul.f32 %v168, %v184
      %v209 = vmul.f32 %v169, %v185
      %v210 = vmul.f32 %v170, %v186
      %v211 = vmul.f32 %v171, %v187
      %v212 = vmul.f32 %v172, %v188
      %v213 = vmul.f32 %v173, %v189
      %v214 = vmul.f32 %v174, %v190
      %v215 = vmul.f32 %v175, %v191
      %v216 = vmul.f32 %v176, %v184
      %v217 = vmul.f32 %v177, %v185
      %v218 = vmul.f32 %v178, %v186
      %v219 = vmul.f32 %v179, %v187
      %v220 = vmul.f32 %v180, %v188
      %v221 = vmul.f32 %v181, %v189
      %v222 = vmul.f32 %v182, %v190
      %v223 = vmul.f32 %v183, %v191
      %224 = vst [vmem:[%s150] sm:$0xff] %v192
      %225 = vst [vmem:[%s150 + $0x8] sm:$0xff] %v193
      %226 = vst [vmem:[%s150 + $0x10] sm:$0xff] %v194
      %227 = vst [vmem:[%s150 + $0x18] sm:$0xff] %v195
      %228 = vst [vmem:[%s150 + $0x20] sm:$0xff] %v196
      %229 = vst [vmem:[%s150 + $0x28] sm:$0xff] %v197
      %230 = vst [vmem:[%s150 + $0x30] sm:$0xff] %v198
      %231 = vst [vmem:[%s150 + $0x38] sm:$0xff] %v199
      %232 = vst [vmem:[%s150 + $0x40] sm:$0xff] %v200
      %233 = vst [vmem:[%s150 + $0x48] sm:$0xff] %v201
      %234 = vst [vmem:[%s150 + $0x50] sm:$0xff] %v202
      %235 = vst [vmem:[%s150 + $0x58] sm:$0xff] %v203
      %236 = vst [vmem:[%s150 + $0x60] sm:$0xff] %v204
      %237 = vst [vmem:[%s150 + $0x68] sm:$0xff] %v205
      %238 = vst [vmem:[%s150 + $0x70] sm:$0xff] %v206
      %239 = vst [vmem:[%s150 + $0x78] sm:$0xff] %v207
      %240 = vst [vmem:[%s150 + $0x80] sm:$0xff] %v208
      %241 = vst [vmem:[%s150 + $0x88] sm:$0xff] %v209
      %242 = vst [vmem:[%s150 + $0x90] sm:$0xff] %v210
      %243 = vst [vmem:[%s150 + $0x98] sm:$0xff] %v211
      %244 = vst [vmem:[%s150 + $0xa0] sm:$0xff] %v212
      %245 = vst [vmem:[%s150 + $0xa8] sm:$0xff] %v213
      %246 = vst [vmem:[%s150 + $0xb0] sm:$0xff] %v214
      %247 = vst [vmem:[%s150 + $0xb8] sm:$0xff] %v215
      %248 = vst [vmem:[%s150 + $0xc0] sm:$0xff] %v216
      %249 = vst [vmem:[%s150 + $0xc8] sm:$0xff] %v217
      %250 = vst [vmem:[%s150 + $0xd0] sm:$0xff] %v218
      %251 = vst [vmem:[%s150 + $0xd8] sm:$0xff] %v219
      %252 = vst [vmem:[%s150 + $0xe0] sm:$0xff] %v220
      %253 = vst [vmem:[%s150 + $0xe8] sm:$0xff] %v221
      %254 = vst [vmem:[%s150 + $0xf0] sm:$0xff] %v222
      %255 = vst [vmem:[%s150 + $0xf8] sm:$0xff] %v223
      %s256 = smul.u32 4, %s13
      %p257 = scmp.lt.s32.totalorder %s256, 7
      %s258 = scalar_select %p257, %s256, 7
      %s259 = smul.addr %s258, 8
      %s260 = smul.addr %s259, 8
      %s261 = scalar_lea.vmem %s2, %s260
      // Predicated region
      $region29: #{recon_forward.1} parent=27 // pred_check
        %p262 = pneg %p78
      $region30: #{recon_forward.1} parent=27 // pred_check_branch
        %264 = sbr.rel (%p262) target = $region32
      $region31: #{recon_forward.1} parent=27 // pred_region
        %s265 = smul.u32 4, %s13
      $region32: #{recon_forward.1} parent=27 // pred_fallthru
        _
    $region28: #{recon_forward.1} parent=5 // pred_fallthru
      _
    %p266 = scmp.le.s32.totalorder 2, %s8
    // Predicated region
    $region33: #{recon_forward.1} parent=5 // pred_check
      %p267 = pneg %p266
    $region34: #{recon_forward.1} parent=5 // pred_check_branch
      %269 = sbr.rel (%p267) target = $region36
    $region35: #{recon_forward.1} parent=5 // pred_region
      %s270 = ssub.s32 %s8, 2
      // Predicated region
      $region37: #{recon_forward.1} parent=35 // pred_check
        %p271 = pneg %p84
      $region38: #{recon_forward.1} parent=35 // pred_check_branch
        %273 = sbr.rel (%p271) target = $region40
      $region39: #{recon_forward.1} parent=35 // pred_region
        %s274 = smul.u32 4, %s14
        %p275 = scmp.lt.s32.totalorder %s274, 7
        %s276 = scalar_select %p275, %s274, 7
        %s277 = smul.addr %s276, 8
        %s278 = smul.addr %s277, 8
        %s279 = scalar_lea.vmem %s2, %s278
      $region40: #{recon_forward.1} parent=35 // pred_fallthru
        _
    $region36: #{recon_forward.1} parent=5 // pred_fallthru
      _
  $region6: #{recon_forward.1} parent=0 // loop_footer
    %s12 = sadd.s32 1, %s8
  $region7: #{recon_forward.1} parent=0 // loop_footer_branch
    %7 = sbr.rel target = $region3
  $region8: #{recon_forward.1} parent=0 // loop_exit
    _

</llo_original>
